<compile_context>
chip_gen: v6e
topology: v6e:2x2x1
jax: 0.10.0
libtpu: 0.0.40
codegen_flags: <defaults>
</compile_context>

<pallas_src>
import jax
import jax.numpy as jnp
from jax.experimental import pallas as pl
from jax.experimental.pallas import tpu as pltpu

D_MODEL = 256
NORM_EPS = 1e-6


def _round_up(x, m):
    return (x + m - 1) // m * m


def _norm_layer(h):
    # PyTorch NormLayer: (x - mean) / (std + eps), torch.std unbiased (ddof=1).
    # Two-pass variance (no catastrophic cancellation) + per-row reciprocal multiply.
    n = h.shape[-1]
    m = jnp.sum(h, axis=-1, keepdims=True) * (1.0 / n)
    d = h - m
    var = jnp.sum(d * d, axis=-1, keepdims=True) * (1.0 / (n - 1))
    inv = pl.reciprocal(jnp.sqrt(var) + NORM_EPS)
    return d * inv


def _make_kernel(cad, ecad, hd_sect, rc_sect, out_wp):
    D = D_MODEL
    two_cad = 2 * cad
    four_cad = 4 * cad
    out_w = four_cad + ecad
    out_pad = out_wp - out_w

    def kernel(lhs_ref, eps_ref, w_entry, w_mid, w_la, b_all, out_ref):
        f32, bf16 = jnp.float32, jnp.bfloat16

        # --- fused entry matmul: [emb|state|ca] @ blockdiag([w_c1|w_c2], w_en) ---
        entry = (
            jnp.dot(lhs_ref[...].astype(bf16), w_entry[...], preferred_element_type=f32)
            + b_all[:, 0:3 * D]
        )                                   # (bt, 768) = [cond1 | cond2 | enc]
        cond1 = entry[:, 0:D]
        cond2 = entry[:, D:2 * D]
        enc = entry[:, 2 * D:3 * D]

        # --- encoder ---
        h = _norm_layer(cond1 * enc)
        # FeedForward.linear_1 + relu (dropout is identity in eval mode)
        x = jnp.maximum(
            jnp.dot(h.astype(bf16), w_mid[:, 0:D], preferred_element_type=f32)
            + b_all[:, 3 * D:4 * D],
            0.0,
        )

        # fused heads, columns [mu1 | mu2 | std1 | std2]
        pre = (
            jnp.dot(x.astype(bf16), w_mid[:, D:D + four_cad], preferred_element_type=f32)
            + b_all[:, 4 * D:4 * D + four_cad]
        )
        mu = jnp.tanh(pre[:, 0:two_cad])
        e = jnp.exp(pre[:, two_cad:four_cad])
        std = jnp.log(1.0 + e)              # softplus
        sigma = jnp.sqrt(1.0 + e)           # exp(0.5 * softplus), no second exp
        z = eps_ref[...] * sigma + mu       # [z1 | z2]

        # --- decoder ---
        lat = (
            jnp.dot(z.astype(bf16), w_la[...], preferred_element_type=f32)
            + b_all[:, 4 * D + hd_sect:5 * D + hd_sect]
        )
        hl = _norm_layer(cond2 * lat)
        dec = jnp.tanh(
            jnp.dot(hl.astype(bf16), w_mid[:, D + hd_sect:D + hd_sect + ecad],
                    preferred_element_type=f32)
            + b_all[:, 5 * D + hd_sect:5 * D + hd_sect + ecad]
        )

        # single lane-dense (padded-to-128) store: [mu1|mu2|std1|std2|dec|0...]
        pieces = [mu, std, dec]
        if out_pad:
            pieces.append(jnp.zeros((mu.shape[0], out_pad), f32))
        out_ref[...] = jnp.concatenate(pieces, axis=-1)

    return kernel


def prepare_params(raw):
    """Pack per-layer PyTorch-style params into the kernel's fused layout (bf16 weights)."""
    D = D_MODEL
    bf16 = jnp.bfloat16
    cond_in = raw["w_c1"].shape[0]           # discrete_action_dim + state_dim
    ecad = raw["w_en"].shape[0]
    cad = raw["w_m1"].shape[1]
    four_cad = 4 * cad
    k_entry = cond_in + ecad
    hd_sect = _round_up(four_cad, 128)
    rc_sect = _round_up(ecad, 128)

    # block-diagonal entry weight: rows [es | ca], cols [cond1 | cond2 | enc]
    w_entry = jnp.zeros((k_entry, 3 * D), jnp.float32)
    w_entry = w_entry.at[:cond_in, 0:D].set(raw["w_c1"])
    w_entry = w_entry.at[:cond_in, D:2 * D].set(raw["w_c2"])
    w_entry = w_entry.at[cond_in:, 2 * D:3 * D].set(raw["w_en"])

    # mid weights: [w_l1 (256) | w_hd (pad->128) | w_rc (pad->128)], 128-aligned sections
    w_hd = jnp.concatenate([raw["w_m1"], raw["w_m2"], raw["w_s1"], raw["w_s2"]], axis=1)
    w_mid = jnp.zeros((D, D + hd_sect + rc_sect), jnp.float32)
    w_mid = w_mid.at[:, 0:D].set(raw["w_l1"])
    w_mid = w_mid.at[:, D:D + four_cad].set(w_hd)
    w_mid = w_mid.at[:, D + hd_sect:D + hd_sect + ecad].set(raw["w_rc"])

    # one bias row: [b_c1|b_c2|b_en | b_l1 | b_hd pad | b_la | b_rc pad]
    b_hd = jnp.concatenate([raw["b_m1"], raw["b_m2"], raw["b_s1"], raw["b_s2"]], axis=1)
    b_all = jnp.zeros((1, 3 * D + D + hd_sect + D + rc_sect), jnp.float32)
    b_all = b_all.at[:, 0:D].set(raw["b_c1"])
    b_all = b_all.at[:, D:2 * D].set(raw["b_c2"])
    b_all = b_all.at[:, 2 * D:3 * D].set(raw["b_en"])
    b_all = b_all.at[:, 3 * D:4 * D].set(raw["b_l1"])
    b_all = b_all.at[:, 4 * D:4 * D + four_cad].set(b_hd)
    b_all = b_all.at[:, 4 * D + hd_sect:5 * D + hd_sect].set(raw["b_la"])
    b_all = b_all.at[:, 5 * D + hd_sect:5 * D + hd_sect + ecad].set(raw["b_rc"])

    return {
        "w_entry": w_entry.astype(bf16),
        "w_mid": w_mid.astype(bf16),
        "w_la": raw["w_la"].astype(bf16),
        "b_all": b_all,
        "dims": dict(cad=int(cad), ecad=int(ecad), hd_sect=int(hd_sect), rc_sect=int(rc_sect)),
    }


def vae_forward(embedding, state, continue_action, eps, params, *, b_tile=1024, min_tiles=2):
    """Whole VAE forward in one Pallas kernel with a balanced, parallel batch grid.

    eps is packed noise [eps1 | eps2] of shape (B, 2*cad).
    Returns (mu1, std1, mu2, std2, decode_action) in f32.
    """
    B = embedding.shape[0]
    dims = params["dims"]
    cad, ecad = dims["cad"], dims["ecad"]
    hd_sect, rc_sect = dims["hd_sect"], dims["rc_sect"]
    out_w = 4 * cad + ecad
    out_wp = _round_up(out_w, 128)

    # balanced tiling; >=2 programs whenever possible so v7x's 2 TCs both get work
    n_tiles = max(pl.cdiv(B, b_tile), min_tiles)
    n_tiles = min(n_tiles, max(pl.cdiv(B, 8), 1))
    bt = _round_up(pl.cdiv(B, n_tiles), 8)
    Bp = bt * n_tiles

    # pack activations: one matmul LHS stream + eps (no wrapper concat of es needed)
    lhs = jnp.concatenate([embedding, state, continue_action], axis=-1)

    def pad_rows(a):
        return a if a.shape[0] == Bp else jnp.pad(a, ((0, Bp - a.shape[0]), (0, 0)))

    lhs = pad_rows(lhs)
    eps_p = pad_rows(eps)

    kernel = _make_kernel(cad, ecad, hd_sect, rc_sect, out_wp)

    def row_spec(a):
        return pl.BlockSpec((bt, a.shape[-1]), lambda i: (i, 0))

    def resident_spec(a):
        # same block every grid step -> VMEM-resident, DMA'd once
        return pl.BlockSpec(a.shape, lambda i: (0, 0))

    packed = pl.pallas_call(
        kernel,
        grid=(n_tiles,),
        out_shape=jax.ShapeDtypeStruct((Bp, out_wp), jnp.float32),
        in_specs=[row_spec(lhs), row_spec(eps_p),
                  resident_spec(params["w_entry"]), resident_spec(params["w_mid"]),
                  resident_spec(params["w_la"]), resident_spec(params["b_all"])],
        out_specs=pl.BlockSpec((bt, out_wp), lambda i: (i, 0)),
        compiler_params=pltpu.CompilerParams(dimension_semantics=("parallel",)),
    )(lhs, eps_p, params["w_entry"], params["w_mid"], params["w_la"], params["b_all"])

    packed = packed[:B]
    mu1 = packed[:, 0:cad]
    mu2 = packed[:, cad:2 * cad]
    std1 = packed[:, 2 * cad:3 * cad]
    std2 = packed[:, 3 * cad:4 * cad]
    dec = packed[:, 4 * cad:4 * cad + ecad]
    return mu1, std1, mu2, std2, dec


# ---------------- pure-JAX reference (mirrors the PyTorch forward) ----------------
def vae_reference(embedding, state, ca, eps, raw, matmul_dtype=jnp.float32):
    def mm(x, w):
        return jnp.dot(x.astype(matmul_dtype), w.astype(matmul_dtype),
                       preferred_element_type=jnp.float32)

    def norm(h):
        m = h.mean(-1, keepdims=True)
        var = ((h - m) ** 2).sum(-1, keepdims=True) / (h.shape[-1] - 1)
        return (h - m) / (jnp.sqrt(var) + NORM_EPS)

    es = jnp.concatenate([embedding, state], -1)
    cond = mm(es, raw["w_c1"]) + raw["b_c1"]
    enc = mm(ca, raw["w_en"]) + raw["b_en"]
    h = norm(cond * enc)
    x = jax.nn.relu(mm(h, raw["w_l1"]) + raw["b_l1"])
    mu1 = jnp.tanh(mm(x, raw["w_m1"]) + raw["b_m1"])
    std1 = jax.nn.softplus(mm(x, raw["w_s1"]) + raw["b_s1"])
    mu2 = jnp.tanh(mm(x, raw["w_m2"]) + raw["b_m2"])
    std2 = jax.nn.softplus(mm(x, raw["w_s2"]) + raw["b_s2"])
    cad = mu1.shape[-1]
    eps1, eps2 = eps[:, :cad], eps[:, cad:]
    z1 = eps1 * jnp.exp(0.5 * std1) + mu1
    z2 = eps2 * jnp.exp(0.5 * std2) + mu2
    z = jnp.concatenate([z1, z2], -1)
    lat = mm(z, raw["w_la"]) + raw["b_la"]
    cond2 = mm(es, raw["w_c2"]) + raw["b_c2"]
    hl = norm(cond2 * lat)
    dec = jnp.tanh(mm(hl, raw["w_rc"]) + raw["b_rc"])
    return mu1, std1, mu2, std2, dec


# ---------------- deterministic parameter init (PyTorch nn.Linear style) ----------------
def init_linear(key, fan_in, fan_out):
    kw, kb = jax.random.split(key)
    bound = 1.0 / jnp.sqrt(float(fan_in))
    w = jax.random.uniform(kw, (fan_in, fan_out), jnp.float32, -bound, bound)
    b = jax.random.uniform(kb, (1, fan_out), jnp.float32, -bound, bound)
    return w, b


if __name__ == "__main__":
    # small, forward-consistent shapes
    B = 8
    discrete_action_dim = 8
    continue_action_dim = 8        # latent dim (cad)
    env_continue_action_dim = 8    # ecad
    state_dim = 24

    key = jax.random.PRNGKey(0)
    keys = jax.random.split(key, 20)

    # inputs
    discrete_action = jax.random.randint(keys[0], (B,), 0, 2)
    continue_action = jax.random.normal(keys[1], (B, env_continue_action_dim), jnp.float32)
    state = jax.random.normal(keys[2], (B, state_dim), jnp.float32)
    # packed reparameterization noise [eps1 | eps2]  (iid normal == two separate draws)
    eps = jax.random.normal(keys[3], (B, 2 * continue_action_dim), jnp.float32)

    # parameters (PyTorch layout, transposed to (in, out))
    emb_table = jax.random.normal(keys[4], (2, discrete_action_dim), jnp.float32)  # nn.Embedding(2, dad)
    cond_in = discrete_action_dim + state_dim
    raw = {}
    raw["w_c1"], raw["b_c1"] = init_linear(keys[5], cond_in, D_MODEL)                       # condition1
    raw["w_en"], raw["b_en"] = init_linear(keys[6], env_continue_action_dim, D_MODEL)       # encoding
    raw["w_l1"], raw["b_l1"] = init_linear(keys[7], D_MODEL, D_MODEL)                       # ff.linear_1
    raw["w_m1"], raw["b_m1"] = init_linear(keys[8], D_MODEL, continue_action_dim)           # ff.mean1
    raw["w_s1"], raw["b_s1"] = init_linear(keys[9], D_MODEL, continue_action_dim)           # ff.log_std1
    raw["w_m2"], raw["b_m2"] = init_linear(keys[10], D_MODEL, continue_action_dim)          # ff.mean2
    raw["w_s2"], raw["b_s2"] = init_linear(keys[11], D_MODEL, continue_action_dim)          # ff.log_std2
    raw["w_c2"], raw["b_c2"] = init_linear(keys[12], cond_in, D_MODEL)                      # condition2
    raw["w_la"], raw["b_la"] = init_linear(keys[13], 2 * continue_action_dim, D_MODEL)      # latent
    raw["w_rc"], raw["b_rc"] = init_linear(keys[14], D_MODEL, env_continue_action_dim)      # re_continue

    # glue: nn.Embedding lookup (row gather) stays in the JAX wrapper
    # TODO(synk): embedding gather could be folded in via scalar-prefetch row indexing if it ever mattered.
    embedding = emb_table[discrete_action]                 # (B, dad)

    params = prepare_params(raw)

    outs = vae_forward(embedding, state, continue_action, eps, params)
    outs = jax.block_until_ready(outs)

    # tight check: kernel vs a JAX reference using the same bf16-weight / f32-accumulate policy
    refs_mixed = vae_reference(embedding, state, continue_action, eps, raw,
                               matmul_dtype=jnp.bfloat16)
    # loose sanity check: kernel (bf16 weights) vs the full-f32 PyTorch-semantics reference
    refs_f32 = vae_reference(embedding, state, continue_action, eps, raw,
                             matmul_dtype=jnp.float32)

    names = ["mu1", "std1", "mu2", "std2", "decode_action"]
    for name, o, rm, rf in zip(names, outs, refs_mixed, refs_f32):
        assert o.shape == rm.shape and o.dtype == jnp.float32
        assert jnp.allclose(o, rm, rtol=2e-3, atol=2e-3), f"{name}: mismatch vs mixed-precision reference"
        assert jnp.allclose(o, rf, rtol=1e-1, atol=1e-1), f"{name}: mismatch vs f32 reference"

    print("KERNEL_OK")
</pallas_src>

<mosaic_0001>
module attributes {stable_mosaic.version = 11 : i64} {
  func.func @kernel(%arg0: i32, %arg1: memref<8x40xf32, #tpu.memory_space<vmem>>, %arg2: memref<8x16xf32, #tpu.memory_space<vmem>>, %arg3: memref<40x768xbf16, #tpu.memory_space<vmem>>, %arg4: memref<256x512xbf16, #tpu.memory_space<vmem>>, %arg5: memref<16x256xbf16, #tpu.memory_space<vmem>>, %arg6: memref<1x1536xf32, #tpu.memory_space<vmem>>, %arg7: memref<8x128xf32, #tpu.memory_space<vmem>>) attributes {dimension_semantics = [#tpu.dimension_semantics<parallel>], iteration_bounds = array<i64: 1>, scalar_prefetch = 0 : i64, scratch_operands = 0 : i64, tpu.core_type = #tpu.core_type<tc>, window_params = [{transform_indices = @transform_0, window_bounds = array<i64: 8, 40>}, {transform_indices = @transform_1, window_bounds = array<i64: 8, 16>}, {pipeline_mode = #tpu.pipeline_mode<synchronous>, transform_indices = @transform_2, window_bounds = array<i64: 40, 768>}, {pipeline_mode = #tpu.pipeline_mode<synchronous>, transform_indices = @transform_3, window_bounds = array<i64: 256, 512>}, {pipeline_mode = #tpu.pipeline_mode<synchronous>, transform_indices = @transform_4, window_bounds = array<i64: 16, 256>}, {pipeline_mode = #tpu.pipeline_mode<synchronous>, transform_indices = @transform_5, window_bounds = array<i64: 1, 1536>}, {transform_indices = @transform_6, window_bounds = array<i64: 8, 128>}]} {
    %c0 = arith.constant 0 : index
    %c0_0 = arith.constant 0 : index
    %0 = vector.load %arg1[%c0, %c0_0] : memref<8x40xf32, #tpu.memory_space<vmem>>, vector<8x40xf32>
    %1 = arith.truncf %0 : vector<8x40xf32> to vector<8x40xbf16>
    %c0_1 = arith.constant 0 : index
    %c0_2 = arith.constant 0 : index
    %2 = vector.load %arg3[%c0_1, %c0_2] : memref<40x768xbf16, #tpu.memory_space<vmem>>, vector<40x768xbf16>
    %cst = arith.constant dense<0.000000e+00> : vector<8x768xf32>
    %3 = tpu.matmul %1, %2, %cst {dimension_numbers = #tpu.dot_dimension_numbers<[1], [0], [0], [1], [0, 0, 1, 1], [], []>} : vector<8x40xbf16>, vector<40x768xbf16>, vector<8x768xf32> -> vector<8x768xf32>
    %c0_3 = arith.constant 0 : index
    %c0_4 = arith.constant 0 : index
    %4 = vector.load %arg6[%c0_3, %c0_4] : memref<1x1536xf32, #tpu.memory_space<vmem>>, vector<1x768xf32>
    %5 = vector.broadcast %4 : vector<1x768xf32> to vector<8x768xf32>
    %6 = arith.addf %3, %5 : vector<8x768xf32>
    %7 = vector.extract_strided_slice %6 {offsets = [0, 0], sizes = [8, 256], strides = [1, 1]} : vector<8x768xf32> to vector<8x256xf32>
    %8 = vector.extract_strided_slice %6 {offsets = [0, 256], sizes = [8, 256], strides = [1, 1]} : vector<8x768xf32> to vector<8x256xf32>
    %9 = vector.extract_strided_slice %6 {offsets = [0, 512], sizes = [8, 256], strides = [1, 1]} : vector<8x768xf32> to vector<8x256xf32>
    %10 = arith.mulf %7, %9 : vector<8x256xf32>
    %cst_5 = arith.constant dense<0.000000e+00> : vector<8xf32>
    %11 = vector.multi_reduction <add>, %10, %cst_5 [1] : vector<8x256xf32> to vector<8xf32>
    %12 = vector.shape_cast %11 : vector<8xf32> to vector<8x1xf32>
    %cst_6 = arith.constant 3.906250e-03 : f32
    %13 = vector.broadcast %cst_6 : f32 to vector<8x1xf32>
    %14 = arith.mulf %12, %13 : vector<8x1xf32>
    %15 = vector.broadcast %14 : vector<8x1xf32> to vector<8x256xf32>
    %16 = arith.subf %10, %15 : vector<8x256xf32>
    %17 = arith.mulf %16, %16 : vector<8x256xf32>
    %cst_7 = arith.constant dense<0.000000e+00> : vector<8xf32>
    %18 = vector.multi_reduction <add>, %17, %cst_7 [1] : vector<8x256xf32> to vector<8xf32>
    %19 = vector.shape_cast %18 : vector<8xf32> to vector<8x1xf32>
    %cst_8 = arith.constant 0.00392156886 : f32
    %20 = vector.broadcast %cst_8 : f32 to vector<8x1xf32>
    %21 = arith.mulf %19, %20 : vector<8x1xf32>
    %22 = math.sqrt %21 : vector<8x1xf32>
    %cst_9 = arith.constant 9.99999997E-7 : f32
    %23 = vector.broadcast %cst_9 : f32 to vector<8x1xf32>
    %24 = arith.addf %22, %23 : vector<8x1xf32>
    %25 = tpu.reciprocal %24 : vector<8x1xf32> -> vector<8x1xf32>
    %26 = vector.broadcast %25 : vector<8x1xf32> to vector<8x256xf32>
    %27 = arith.mulf %16, %26 : vector<8x256xf32>
    %28 = arith.truncf %27 : vector<8x256xf32> to vector<8x256xbf16>
    %c0_10 = arith.constant 0 : index
    %c0_11 = arith.constant 0 : index
    %29 = vector.load %arg4[%c0_10, %c0_11] : memref<256x512xbf16, #tpu.memory_space<vmem>>, vector<256x256xbf16>
    %cst_12 = arith.constant dense<0.000000e+00> : vector<8x256xf32>
    %30 = tpu.matmul %28, %29, %cst_12 {dimension_numbers = #tpu.dot_dimension_numbers<[1], [0], [0], [1], [0, 0, 1, 1], [], []>} : vector<8x256xbf16>, vector<256x256xbf16>, vector<8x256xf32> -> vector<8x256xf32>
    %c0_13 = arith.constant 0 : index
    %c768 = arith.constant 768 : index
    %31 = vector.load %arg6[%c0_13, %c768] : memref<1x1536xf32, #tpu.memory_space<vmem>>, vector<1x256xf32>
    %32 = vector.broadcast %31 : vector<1x256xf32> to vector<8x256xf32>
    %33 = arith.addf %30, %32 : vector<8x256xf32>
    %cst_14 = arith.constant 0.000000e+00 : f32
    %34 = vector.broadcast %cst_14 : f32 to vector<8x256xf32>
    %35 = arith.maximumf %33, %34 : vector<8x256xf32>
    %36 = arith.truncf %35 : vector<8x256xf32> to vector<8x256xbf16>
    %c0_15 = arith.constant 0 : index
    %c256 = arith.constant 256 : index
    %37 = vector.load %arg4[%c0_15, %c256] : memref<256x512xbf16, #tpu.memory_space<vmem>>, vector<256x32xbf16>
    %cst_16 = arith.constant dense<0.000000e+00> : vector<8x32xf32>
    %38 = tpu.matmul %36, %37, %cst_16 {dimension_numbers = #tpu.dot_dimension_numbers<[1], [0], [0], [1], [0, 0, 1, 1], [], []>} : vector<8x256xbf16>, vector<256x32xbf16>, vector<8x32xf32> -> vector<8x32xf32>
    %c0_17 = arith.constant 0 : index
    %c1024 = arith.constant 1024 : index
    %39 = vector.load %arg6[%c0_17, %c1024] : memref<1x1536xf32, #tpu.memory_space<vmem>>, vector<1x32xf32>
    %40 = vector.broadcast %39 : vector<1x32xf32> to vector<8x32xf32>
    %41 = arith.addf %38, %40 : vector<8x32xf32>
    %42 = vector.extract_strided_slice %41 {offsets = [0, 0], sizes = [8, 16], strides = [1, 1]} : vector<8x32xf32> to vector<8x16xf32>
    %43 = math.tanh %42 : vector<8x16xf32>
    %44 = vector.extract_strided_slice %41 {offsets = [0, 16], sizes = [8, 16], strides = [1, 1]} : vector<8x32xf32> to vector<8x16xf32>
    %45 = math.exp %44 : vector<8x16xf32>
    %cst_18 = arith.constant 1.000000e+00 : f32
    %46 = vector.broadcast %cst_18 : f32 to vector<8x16xf32>
    %47 = arith.addf %46, %45 : vector<8x16xf32>
    %48 = math.log %47 : vector<8x16xf32>
    %cst_19 = arith.constant 1.000000e+00 : f32
    %49 = vector.broadcast %cst_19 : f32 to vector<8x16xf32>
    %50 = arith.addf %49, %45 : vector<8x16xf32>
    %51 = math.sqrt %50 : vector<8x16xf32>
    %c0_20 = arith.constant 0 : index
    %c0_21 = arith.constant 0 : index
    %52 = vector.load %arg2[%c0_20, %c0_21] : memref<8x16xf32, #tpu.memory_space<vmem>>, vector<8x16xf32>
    %53 = arith.mulf %52, %51 : vector<8x16xf32>
    %54 = arith.addf %53, %43 : vector<8x16xf32>
    %55 = arith.truncf %54 : vector<8x16xf32> to vector<8x16xbf16>
    %c0_22 = arith.constant 0 : index
    %c0_23 = arith.constant 0 : index
    %56 = vector.load %arg5[%c0_22, %c0_23] : memref<16x256xbf16, #tpu.memory_space<vmem>>, vector<16x256xbf16>
    %cst_24 = arith.constant dense<0.000000e+00> : vector<8x256xf32>
    %57 = tpu.matmul %55, %56, %cst_24 {dimension_numbers = #tpu.dot_dimension_numbers<[1], [0], [0], [1], [0, 0, 1, 1], [], []>} : vector<8x16xbf16>, vector<16x256xbf16>, vector<8x256xf32> -> vector<8x256xf32>
    %c0_25 = arith.constant 0 : index
    %c1152 = arith.constant 1152 : index
    %58 = vector.load %arg6[%c0_25, %c1152] : memref<1x1536xf32, #tpu.memory_space<vmem>>, vector<1x256xf32>
    %59 = vector.broadcast %58 : vector<1x256xf32> to vector<8x256xf32>
    %60 = arith.addf %57, %59 : vector<8x256xf32>
    %61 = arith.mulf %8, %60 : vector<8x256xf32>
    %cst_26 = arith.constant dense<0.000000e+00> : vector<8xf32>
    %62 = vector.multi_reduction <add>, %61, %cst_26 [1] : vector<8x256xf32> to vector<8xf32>
    %63 = vector.shape_cast %62 : vector<8xf32> to vector<8x1xf32>
    %cst_27 = arith.constant 3.906250e-03 : f32
    %64 = vector.broadcast %cst_27 : f32 to vector<8x1xf32>
    %65 = arith.mulf %63, %64 : vector<8x1xf32>
    %66 = vector.broadcast %65 : vector<8x1xf32> to vector<8x256xf32>
    %67 = arith.subf %61, %66 : vector<8x256xf32>
    %68 = arith.mulf %67, %67 : vector<8x256xf32>
    %cst_28 = arith.constant dense<0.000000e+00> : vector<8xf32>
    %69 = vector.multi_reduction <add>, %68, %cst_28 [1] : vector<8x256xf32> to vector<8xf32>
    %70 = vector.shape_cast %69 : vector<8xf32> to vector<8x1xf32>
    %cst_29 = arith.constant 0.00392156886 : f32
    %71 = vector.broadcast %cst_29 : f32 to vector<8x1xf32>
    %72 = arith.mulf %70, %71 : vector<8x1xf32>
    %73 = math.sqrt %72 : vector<8x1xf32>
    %cst_30 = arith.constant 9.99999997E-7 : f32
    %74 = vector.broadcast %cst_30 : f32 to vector<8x1xf32>
    %75 = arith.addf %73, %74 : vector<8x1xf32>
    %76 = tpu.reciprocal %75 : vector<8x1xf32> -> vector<8x1xf32>
    %77 = vector.broadcast %76 : vector<8x1xf32> to vector<8x256xf32>
    %78 = arith.mulf %67, %77 : vector<8x256xf32>
    %79 = arith.truncf %78 : vector<8x256xf32> to vector<8x256xbf16>
    %c0_31 = arith.constant 0 : index
    %c384 = arith.constant 384 : index
    %80 = vector.load %arg4[%c0_31, %c384] : memref<256x512xbf16, #tpu.memory_space<vmem>>, vector<256x8xbf16>
    %cst_32 = arith.constant dense<0.000000e+00> : vector<8x8xf32>
    %81 = tpu.matmul %79, %80, %cst_32 {dimension_numbers = #tpu.dot_dimension_numbers<[1], [0], [0], [1], [0, 0, 1, 1], [], []>} : vector<8x256xbf16>, vector<256x8xbf16>, vector<8x8xf32> -> vector<8x8xf32>
    %c0_33 = arith.constant 0 : index
    %c1408 = arith.constant 1408 : index
    %82 = vector.load %arg6[%c0_33, %c1408] : memref<1x1536xf32, #tpu.memory_space<vmem>>, vector<1x8xf32>
    %83 = vector.broadcast %82 : vector<1x8xf32> to vector<8x8xf32>
    %84 = arith.addf %81, %83 : vector<8x8xf32>
    %85 = math.tanh %84 : vector<8x8xf32>
    %cst_34 = arith.constant 0.000000e+00 : f32
    %86 = vector.broadcast %cst_34 : f32 to vector<8x88xf32>
    %87 = tpu.concatenate %43, %48, %85, %86 in 1 : vector<8x16xf32>, vector<8x16xf32>, vector<8x8xf32>, vector<8x88xf32> -> vector<8x128xf32>
    %c0_35 = arith.constant 0 : index
    %c0_36 = arith.constant 0 : index
    %88 = vector.load %arg7[%c0_35, %c0_36] : memref<8x128xf32, #tpu.memory_space<vmem>>, vector<8x128xf32>
    tpu.vector_store %arg7[%c0_35, %c0_36], %87 {strides = array<i32>} : memref<8x128xf32, #tpu.memory_space<vmem>>, vector<8x128xf32>,
    return
  }
  func.func @transform_0(%arg0: i32) -> (i32, i32) {
    %c0_i32 = arith.constant 0 : i32
    %c0_i32_0 = arith.constant 0 : i32
    return %arg0, %c0_i32 : i32, i32
  }
  func.func @transform_1(%arg0: i32) -> (i32, i32) {
    %c0_i32 = arith.constant 0 : i32
    %c0_i32_0 = arith.constant 0 : i32
    return %arg0, %c0_i32 : i32, i32
  }
  func.func @transform_2(%arg0: i32) -> (i32, i32) {
    %c0_i32 = arith.constant 0 : i32
    %c0_i32_0 = arith.constant 0 : i32
    %c0_i32_1 = arith.constant 0 : i32
    return %c0_i32, %c0_i32_0 : i32, i32
  }
  func.func @transform_3(%arg0: i32) -> (i32, i32) {
    %c0_i32 = arith.constant 0 : i32
    %c0_i32_0 = arith.constant 0 : i32
    %c0_i32_1 = arith.constant 0 : i32
    return %c0_i32, %c0_i32_0 : i32, i32
  }
  func.func @transform_4(%arg0: i32) -> (i32, i32) {
    %c0_i32 = arith.constant 0 : i32
    %c0_i32_0 = arith.constant 0 : i32
    %c0_i32_1 = arith.constant 0 : i32
    return %c0_i32, %c0_i32_0 : i32, i32
  }
  func.func @transform_5(%arg0: i32) -> (i32, i32) {
    %c0_i32 = arith.constant 0 : i32
    %c0_i32_0 = arith.constant 0 : i32
    %c0_i32_1 = arith.constant 0 : i32
    return %c0_i32, %c0_i32_0 : i32, i32
  }
  func.func @transform_6(%arg0: i32) -> (i32, i32) {
    %c0_i32 = arith.constant 0 : i32
    %c0_i32_0 = arith.constant 0 : i32
    return %arg0, %c0_i32 : i32, i32
  }
}

</mosaic_0001>

<llo_original>
// kernel: tpu_custom_call.1
$region0: #{tpu_custom_call.1}
  #allocation0 [shape = 'u32[]', space=smem, size = 0x4, offset = 0x4, fixed_abs, tag = 'smem constant byte address 0x4 - core index']
  #allocation1 [shape = 'u32[144,128]{1,0:T(1,128)}', space=vmem, size = 0x12000, scoped, tag = 'internal scratch']
  %s0 = inlined_call_operand.hbm [shape: f32[8,40], index: 0, kind: input, shape index: {}]
  %s1 = inlined_call_operand.hbm [shape: f32[8,16], index: 1, kind: input, shape index: {}]
  %s2 = inlined_call_operand.hbm [shape: bf16[40,768], index: 2, kind: input, shape index: {}]
  %s3 = inlined_call_operand.hbm [shape: bf16[256,512], index: 3, kind: input, shape index: {}]
  %s4 = inlined_call_operand.hbm [shape: bf16[16,256], index: 4, kind: input, shape index: {}]
  %s5 = inlined_call_operand.hbm [shape: f32[1,1536], index: 5, kind: input, shape index: {}]
  %s6 = inlined_call_operand.hbm [shape: f32[8,128], index: 6, kind: output, shape index: {}]
  %s7 = sld [smem:[#allocation0]]
  $region58: #{tpu_custom_call.1} parent=0
    _
  %s9 = ssub.s32 1, %s7
  %s10 = scalar_select 0, %s9, %s7
  $region1: #{tpu_custom_call.1} parent=0
    #allocation2 [shape = 'u8[4096]{0}', space=vmem, size = 0x1000, scoped, tag = 'input window, operand 0, single buffered']
    #allocation3 [shape = 's32[1]{0}', space=sflag, size = 0x4, scoped, tag = 'scoped memory for tpu_custom_call.1']
    #allocation4 [shape = 's32[1]{0}', space=sflag, size = 0x4, scoped, tag = 'scoped memory for tpu_custom_call.1']
    #allocation5 [shape = 'u8[4096]{0}', space=vmem, size = 0x1000, scoped, tag = 'input window, operand 1, single buffered']
    #allocation6 [shape = 's32[1]{0}', space=sflag, size = 0x4, scoped, tag = 'scoped memory for tpu_custom_call.1']
    #allocation7 [shape = 'u8[61440]{0}', space=vmem, size = 0xf000, scoped, tag = 'input window, operand 2, single buffered']
    #allocation8 [shape = 'u8[262144]{0}', space=vmem, size = 0x40000, scoped, tag = 'input window, operand 3, single buffered']
    #allocation9 [shape = 's32[1]{0}', space=sflag, size = 0x4, scoped, tag = 'scoped memory for tpu_custom_call.1']
    #allocation10 [shape = 'u8[8192]{0}', space=vmem, size = 0x2000, scoped, tag = 'input window, operand 4, single buffered']
    #allocation11 [shape = 'u8[6144]{0}', space=vmem, size = 0x1800, scoped, tag = 'input window, operand 5, single buffered']
    #allocation12 [shape = 's32[1]{0}', space=sflag, size = 0x4, scoped, tag = 'scoped memory for tpu_custom_call.1']
    #allocation13 [shape = 'u8[4096]{0}', space=vmem, size = 0x1000, scoped, tag = 'output window, operand 0, single buffered']
    %11 = vsyncpa [#allocation3], 0
    %12 = vsyncpa [#allocation6], 0
    %13 = vsyncpa [#allocation9], 0
    %14 = vsyncpa [#allocation12], 0
    %15 = vsyncpa [#allocation4], 0
    // Predicated region
    $region2: #{tpu_custom_call.1} parent=1 // pred_check
      _
    $region3: #{tpu_custom_call.1} parent=1 // pred_check_branch
      %17 = sbr.rel (0) target = $region5
    $region4: #{tpu_custom_call.1} parent=1 // pred_region
      %s19 = ssub.s32 128, 128
      %20 = vsyncadd [#allocation3], %s19
      %s22 = sshll.u32 [#allocation2], 4
      %s23 = int_to_ptr.vmem [resolvable:$true] %s22
      %25 = dma.hbm_to_vmem [thread:$0]  %s0, 128, %s23, [#allocation3]
    $region5: #{tpu_custom_call.1} parent=1 // pred_fallthru
      _
    // Predicated region
    $region6: #{tpu_custom_call.1} parent=1 // pred_check
      _
    $region7: #{tpu_custom_call.1} parent=1 // pred_check_branch
      %27 = sbr.rel (0) target = $region9
    $region8: #{tpu_custom_call.1} parent=1 // pred_region
      %s29 = ssub.s32 128, 128
      %30 = vsyncadd [#allocation6], %s29
      %s32 = sshll.u32 [#allocation5], 4
      %s33 = int_to_ptr.vmem [resolvable:$true] %s32
      %35 = dma.hbm_to_vmem [thread:$0]  %s1, 128, %s33, [#allocation6]
    $region9: #{tpu_custom_call.1} parent=1 // pred_fallthru
      _
    // Predicated region
    $region10: #{tpu_custom_call.1} parent=1 // pred_check
      _
    $region11: #{tpu_custom_call.1} parent=1 // pred_check_branch
      %37 = sbr.rel (0) target = $region13
    $region12: #{tpu_custom_call.1} parent=1 // pred_region
      %s39 = ssub.s32 1920, 1920
      %40 = vsyncadd [#allocation6], %s39
      %s41 = sshll.u32 [#allocation7], 4
      %s42 = int_to_ptr.vmem [resolvable:$true] %s41
      %47 = dma.hbm_to_vmem [thread:$0]  %s2, 1920, %s42, [#allocation6], 384, 384, 24
    $region13: #{tpu_custom_call.1} parent=1 // pred_fallthru
      _
    // Predicated region
    $region14: #{tpu_custom_call.1} parent=1 // pred_check
      _
    $region15: #{tpu_custom_call.1} parent=1 // pred_check_branch
      %49 = sbr.rel (0) target = $region17
    $region16: #{tpu_custom_call.1} parent=1 // pred_region
      %s51 = ssub.s32 8192, 8192
      %52 = vsyncadd [#allocation9], %s51
      %s53 = sshll.u32 [#allocation8], 4
      %s54 = int_to_ptr.vmem [resolvable:$true] %s53
      %59 = dma.hbm_to_vmem [thread:$0]  %s3, 8192, %s54, [#allocation9], 256, 256, 16
    $region17: #{tpu_custom_call.1} parent=1 // pred_fallthru
      _
    // Predicated region
    $region18: #{tpu_custom_call.1} parent=1 // pred_check
      _
    $region19: #{tpu_custom_call.1} parent=1 // pred_check_branch
      %61 = sbr.rel (0) target = $region21
    $region20: #{tpu_custom_call.1} parent=1 // pred_region
      %s63 = ssub.s32 256, 256
      %64 = vsyncadd [#allocation9], %s63
      %s65 = sshll.u32 [#allocation10], 4
      %s66 = int_to_ptr.vmem [resolvable:$true] %s65
      %71 = dma.hbm_to_vmem [thread:$0]  %s4, 256, %s66, [#allocation9], 128, 128, 8
    $region21: #{tpu_custom_call.1} parent=1 // pred_fallthru
      _
    // Predicated region
    $region22: #{tpu_custom_call.1} parent=1 // pred_check
      _
    $region23: #{tpu_custom_call.1} parent=1 // pred_check_branch
      %73 = sbr.rel (0) target = $region25
    $region24: #{tpu_custom_call.1} parent=1 // pred_region
      %s75 = ssub.s32 192, 192
      %76 = vsyncadd [#allocation12], %s75
      %s78 = sshll.u32 [#allocation11], 4
      %s79 = int_to_ptr.vmem [resolvable:$true] %s78
      %81 = dma.hbm_to_vmem [thread:$0]  %s5, 192, %s79, [#allocation12]
    $region25: #{tpu_custom_call.1} parent=1 // pred_fallthru
      _
    // Predicated region
    $region26: #{tpu_custom_call.1} parent=1 // pred_check
      _
    $region27: #{tpu_custom_call.1} parent=1 // pred_check_branch
      %83 = sbr.rel (0) target = $region29
    $region28: #{tpu_custom_call.1} parent=1 // pred_region
      %84 = dma.done [#allocation3], 128
    $region29: #{tpu_custom_call.1} parent=1 // pred_fallthru
      _
    // Predicated region
    $region30: #{tpu_custom_call.1} parent=1 // pred_check
      _
    $region31: #{tpu_custom_call.1} parent=1 // pred_check_branch
      %86 = sbr.rel (0) target = $region33
    $region32: #{tpu_custom_call.1} parent=1 // pred_region
      %87 = dma.done [#allocation6], 128
    $region33: #{tpu_custom_call.1} parent=1 // pred_fallthru
      _
    // Predicated region
    $region34: #{tpu_custom_call.1} parent=1 // pred_check
      _
    $region35: #{tpu_custom_call.1} parent=1 // pred_check_branch
      %89 = sbr.rel (0) target = $region37
    $region36: #{tpu_custom_call.1} parent=1 // pred_region
      %90 = dma.done [#allocation6], 1920
    $region37: #{tpu_custom_call.1} parent=1 // pred_fallthru
      _
    // Predicated region
    $region38: #{tpu_custom_call.1} parent=1 // pred_check
      _
    $region39: #{tpu_custom_call.1} parent=1 // pred_check_branch
      %92 = sbr.rel (0) target = $region41
    $region40: #{tpu_custom_call.1} parent=1 // pred_region
      %93 = dma.done [#allocation9], 8192
    $region41: #{tpu_custom_call.1} parent=1 // pred_fallthru
      _
    // Predicated region
    $region42: #{tpu_custom_call.1} parent=1 // pred_check
      _
    $region43: #{tpu_custom_call.1} parent=1 // pred_check_branch
      %95 = sbr.rel (0) target = $region45
    $region44: #{tpu_custom_call.1} parent=1 // pred_region
      %96 = dma.done [#allocation9], 256
    $region45: #{tpu_custom_call.1} parent=1 // pred_fallthru
      _
    // Predicated region
    $region46: #{tpu_custom_call.1} parent=1 // pred_check
      _
    $region47: #{tpu_custom_call.1} parent=1 // pred_check_branch
      %98 = sbr.rel (0) target = $region49
    $region48: #{tpu_custom_call.1} parent=1 // pred_region
      %99 = dma.done [#allocation12], 192
    $region49: #{tpu_custom_call.1} parent=1 // pred_fallthru
      _
    %v101 = vld [vmem:[#allocation2] sm:$0xff]
    %v102 = vpack.c.bf16 %v101, %v101
    %v103 = vld [vmem:[#allocation7] sm:$0xff]
    %v104 = vld [vmem:[#allocation7 + $0x8] sm:$0xff]
    %v105 = vld [vmem:[#allocation7 + $0x10] sm:$0xff]
    %v106 = vld [vmem:[#allocation7 + $0x18] sm:$0xff]
    %v107 = vld [vmem:[#allocation7 + $0x20] sm:$0xff]
    %v108 = vld [vmem:[#allocation7 + $0x28] sm:$0xff]
    %v109 = vld [vmem:[#allocation7 + $0x30] sm:$0xff]
    %v110 = vld [vmem:[#allocation7 + $0x38] sm:$0xff]
    %v111 = vld [vmem:[#allocation7 + $0x40] sm:$0xff]
    %v112 = vld [vmem:[#allocation7 + $0x48] sm:$0xff]
    %v113 = vld [vmem:[#allocation7 + $0x50] sm:$0xff]
    %v114 = vld [vmem:[#allocation7 + $0x58] sm:$0xff]
    %v115 = vld [vmem:[#allocation7 + $0x60] sm:$0xff]
    %v116 = vld [vmem:[#allocation7 + $0x68] sm:$0xff]
    %v117 = vld [vmem:[#allocation7 + $0x70] sm:$0xff]
    %v118 = vld [vmem:[#allocation11] sm:$0x3f]
    %v120 = vlaneseq
    %v121 = vshrl.u32 %v120, 7
    %v122 = vsub.s32 0, %v121
    %v123 = vrot.slane %v118, %v122
    %v124 = vlaneseq
    %v125 = vshrl.u32 %v124, 7
    %v126 = vsub.s32 1, %v125
    %v127 = vrot.slane %v118, %v126
    %v128 = vlaneseq
    %v129 = vshrl.u32 %v128, 7
    %v130 = vsub.s32 2, %v129
    %v131 = vrot.slane %v118, %v130
    %v132 = vlaneseq
    %v133 = vshrl.u32 %v132, 7
    %v134 = vsub.s32 3, %v133
    %v135 = vrot.slane %v118, %v134
    %v136 = vlaneseq
    %v137 = vshrl.u32 %v136, 7
    %v138 = vsub.s32 4, %v137
    %v139 = vrot.slane %v118, %v138
    %v140 = vlaneseq
    %v141 = vshrl.u32 %v140, 7
    %v142 = vsub.s32 5, %v141
    %v143 = vrot.slane %v118, %v142
    %v165 = vunpack.c.l.b16 %v103
    %v166 = vunpack.c.h.b16 %v103
    %v167 = vunpack.c.l.b16 %v104
    %v168 = vunpack.c.h.b16 %v104
    %v169 = vunpack.c.l.b16 %v105
    %v170 = vunpack.c.h.b16 %v105
    %v171 = vunpack.c.l.b16 %v106
    %v172 = vunpack.c.h.b16 %v106
    %v173 = vunpack.c.l.b16 %v107
    %v174 = vunpack.c.h.b16 %v107
    %v175 = vunpack.c.l.b16 %v108
    %v176 = vunpack.c.h.b16 %v108
    %v177 = vunpack.c.l.b16 %v109
    %v178 = vunpack.c.h.b16 %v109
    %v179 = vunpack.c.l.b16 %v110
    %v180 = vunpack.c.h.b16 %v110
    %v181 = vunpack.c.l.b16 %v111
    %v182 = vunpack.c.h.b16 %v111
    %v183 = vunpack.c.l.b16 %v112
    %v184 = vunpack.c.h.b16 %v112
    %v185 = vunpack.c.l.b16 %v113
    %v186 = vunpack.c.h.b16 %v113
    %v187 = vunpack.c.l.b16 %v114
    %v188 = vunpack.c.h.b16 %v114
    %v189 = vunpack.c.l.b16 %v115
    %v190 = vunpack.c.h.b16 %v115
    %v191 = vunpack.c.l.b16 %v116
    %v192 = vunpack.c.h.b16 %v116
    %v193 = vunpack.c.l.b16 %v117
    %v194 = vunpack.c.h.b16 %v117
    %v195 = vpack.c.b16 %v171, %v165
    %v196 = vpack.c.b16 %v172, %v166
    %v197 = vpack.c.b16 %v173, %v167
    %v198 = vpack.c.b16 %v174, %v168
    %v199 = vpack.c.b16 %v175, %v169
    %v200 = vpack.c.b16 %v176, %v170
    %v201 = vpack.c.b16 %v183, %v177
    %v202 = vpack.c.b16 %v184, %v178
    %v203 = vpack.c.b16 %v185, %v179
    %v204 = vpack.c.b16 %v186, %v180
    %v205 = vpack.c.b16 %v187, %v181
    %v206 = vpack.c.b16 %v188, %v182
    %v207 = vpack.c.b16 %v189, %v189
    %v208 = vpack.c.b16 %v190, %v190
    %v209 = vpack.c.b16 %v191, %v191
    %v210 = vpack.c.b16 %v192, %v192
    %v211 = vpack.c.b16 %v193, %v193
    %v212 = vpack.c.b16 %v194, %v194
    %vm225 = vcmask 326656
    %v227 = vsel %vm225, %v102, 0
    %vm229 = vcmask 1043456
    %v231 = vsel %vm229, %v207, 0
    %v234 = vsel %vm229, %v208, 0
    %v237 = vsel %vm229, %v209, 0
    %v240 = vsel %vm229, %v210, 0
    %v243 = vsel %vm229, %v211, 0
    %v246 = vsel %vm229, %v212, 0
    %248 = vmatprep.subr.bf16.mxu0 0
    %249 = vmatpush1.bf16.msra.mxu0 0
    %250 = vmatprep.subr.bf16.mxu0 0
    %251 = vmatpush1.bf16.msra.mxu0 0
    %252 = vmatprep.subr.bf16.mxu0 0
    %253 = vmatpush1.bf16.msra.mxu0 0
    %254 = vmatprep.subr.bf16.mxu0 0
    %255 = vmatpush1.bf16.msra.mxu0 0
    %256 = vmatprep.subr.bf16.mxu0 0
    %257 = vmatpush1.bf16.msra.mxu0 0
    %258 = vmatprep.subr.bf16.mxu0 %v234
    %259 = vmatpush1.bf16.msra.mxu0 %v231
    %260 = vmatprep.subr.bf16.mxu0 %v202
    %261 = vmatpush1.bf16.msra.mxu0 %v201
    %262 = vmatprep.subr.bf16.mxu0 %v196
    %263 = vmatpush1.bf16.msra.mxu0 %v195
    %264 = vmatprep.subr.bf16.mxu0 0
    %265 = vmatpush2.bf16.msra.mxu0 0
    %266 = vmatprep.subr.bf16.mxu0 0
    %267 = vmatpush2.bf16.msra.mxu0 0
    %268 = vmatprep.subr.bf16.mxu0 0
    %269 = vmatpush2.bf16.msra.mxu0 0
    %270 = vmatprep.subr.bf16.mxu0 0
    %271 = vmatpush2.bf16.msra.mxu0 0
    %272 = vmatprep.subr.bf16.mxu0 0
    %273 = vmatpush2.bf16.msra.mxu0 0
    %274 = vmatprep.subr.bf16.mxu0 0
    %275 = vmatpush2.bf16.msra.mxu0 0
    %276 = vmatprep.subr.bf16.mxu0 0
    %277 = vmatpush2.bf16.msra.mxu0 0
    %278 = vmatprep.subr.bf16.mxu0 0
    %279 = vmatpush2.bf16.msra.mxu0 0
    %280 = vmatprep.mubr.bf16.mxu0 0
    %281 = vmatmul.mubr.bf16.gmra.mxu0 %v227
    %v282 = vpop.f32.mrf.mxu0
    %v283 = vadd.f32 %v123, %v282
    %v284 = vpop.f32.mrf.mxu0
    %v285 = vadd.f32 %v127, %v284
    %v286 = vpop.f32.mrf.mxu0
    %v287 = vpop.f32.mrf.mxu0
    %288 = vdwg.mxu0
    %289 = vmatprep.subr.bf16.mxu0 0
    %290 = vmatpush1.bf16.msra.mxu0 0
    %291 = vmatprep.subr.bf16.mxu0 0
    %292 = vmatpush1.bf16.msra.mxu0 0
    %293 = vmatprep.subr.bf16.mxu0 0
    %294 = vmatpush1.bf16.msra.mxu0 0
    %295 = vmatprep.subr.bf16.mxu0 0
    %296 = vmatpush1.bf16.msra.mxu0 0
    %297 = vmatprep.subr.bf16.mxu0 0
    %298 = vmatpush1.bf16.msra.mxu0 0
    %299 = vmatprep.subr.bf16.mxu0 %v240
    %300 = vmatpush1.bf16.msra.mxu0 %v237
    %301 = vmatprep.subr.bf16.mxu0 %v204
    %302 = vmatpush1.bf16.msra.mxu0 %v203
    %303 = vmatprep.subr.bf16.mxu0 %v198
    %304 = vmatpush1.bf16.msra.mxu0 %v197
    %305 = vmatprep.subr.bf16.mxu0 0
    %306 = vmatpush2.bf16.msra.mxu0 0
    %307 = vmatprep.subr.bf16.mxu0 0
    %308 = vmatpush2.bf16.msra.mxu0 0
    %309 = vmatprep.subr.bf16.mxu0 0
    %310 = vmatpush2.bf16.msra.mxu0 0
    %311 = vmatprep.subr.bf16.mxu0 0
    %312 = vmatpush2.bf16.msra.mxu0 0
    %313 = vmatprep.subr.bf16.mxu0 0
    %314 = vmatpush2.bf16.msra.mxu0 0
    %315 = vmatprep.subr.bf16.mxu0 0
    %316 = vmatpush2.bf16.msra.mxu0 0
    %317 = vmatprep.subr.bf16.mxu0 0
    %318 = vmatpush2.bf16.msra.mxu0 0
    %319 = vmatprep.subr.bf16.mxu0 0
    %320 = vmatpush2.bf16.msra.mxu0 0
    %321 = vmatprep.mubr.bf16.mxu0 0
    %322 = vmatmul.mubr.bf16.gmra.mxu0 %v227
    %v323 = vpop.f32.mrf.mxu0
    %v324 = vadd.f32 %v131, %v323
    %v325 = vpop.f32.mrf.mxu0
    %v326 = vadd.f32 %v135, %v325
    %v327 = vpop.f32.mrf.mxu0
    %v328 = vpop.f32.mrf.mxu0
    %329 = vdwg.mxu0
    %330 = vmatprep.subr.bf16.mxu0 0
    %331 = vmatpush1.bf16.msra.mxu0 0
    %332 = vmatprep.subr.bf16.mxu0 0
    %333 = vmatpush1.bf16.msra.mxu0 0
    %334 = vmatprep.subr.bf16.mxu0 0
    %335 = vmatpush1.bf16.msra.mxu0 0
    %336 = vmatprep.subr.bf16.mxu0 0
    %337 = vmatpush1.bf16.msra.mxu0 0
    %338 = vmatprep.subr.bf16.mxu0 0
    %339 = vmatpush1.bf16.msra.mxu0 0
    %340 = vmatprep.subr.bf16.mxu0 %v246
    %341 = vmatpush1.bf16.msra.mxu0 %v243
    %342 = vmatprep.subr.bf16.mxu0 %v206
    %343 = vmatpush1.bf16.msra.mxu0 %v205
    %344 = vmatprep.subr.bf16.mxu0 %v200
    %345 = vmatpush1.bf16.msra.mxu0 %v199
    %346 = vmatprep.subr.bf16.mxu0 0
    %347 = vmatpush2.bf16.msra.mxu0 0
    %348 = vmatprep.subr.bf16.mxu0 0
    %349 = vmatpush2.bf16.msra.mxu0 0
    %350 = vmatprep.subr.bf16.mxu0 0
    %351 = vmatpush2.bf16.msra.mxu0 0
    %352 = vmatprep.subr.bf16.mxu0 0
    %353 = vmatpush2.bf16.msra.mxu0 0
    %354 = vmatprep.subr.bf16.mxu0 0
    %355 = vmatpush2.bf16.msra.mxu0 0
    %356 = vmatprep.subr.bf16.mxu0 0
    %357 = vmatpush2.bf16.msra.mxu0 0
    %358 = vmatprep.subr.bf16.mxu0 0
    %359 = vmatpush2.bf16.msra.mxu0 0
    %360 = vmatprep.subr.bf16.mxu0 0
    %361 = vmatpush2.bf16.msra.mxu0 0
    %362 = vmatprep.mubr.bf16.mxu0 0
    %363 = vmatmul.mubr.bf16.gmra.mxu0 %v227
    %v364 = vpop.f32.mrf.mxu0
    %v365 = vadd.f32 %v139, %v364
    %v366 = vpop.f32.mrf.mxu0
    %v367 = vadd.f32 %v143, %v366
    %v368 = vpop.f32.mrf.mxu0
    %v369 = vpop.f32.mrf.mxu0
    %370 = vdwg.mxu0
    %v371 = vmul.f32 %v283, %v365
    %v372 = vmul.f32 %v285, %v367
    %v373 = vadd.f32 %v371, %v372
    %374 = vadd.xlane.f32.xlu0 %v373
    %v375 = vpop.xlane.xlu0 %374
    %v376 = vmul.f32 %v375, 0.00390625
    %v377 = vsub.f32 %v371, %v376
    %v378 = vsub.f32 %v372, %v376
    %v379 = vmul.f32 %v377, %v377
    %v380 = vmul.f32 %v378, %v378
    %v381 = vadd.f32 %v379, %v380
    %382 = vadd.xlane.f32.xlu0 %v381
    %v383 = vpop.xlane.xlu0 %382
    %v384 = vmul.f32 %v383, 0.003921569
    %v385 = vrsqrt.pop %v384
    %v386 = vmul.f32 %v384, %v385
    %vm387 = vcmp.eq.f32.partialorder %v384, inf
    %v388 = vsel %vm387, %v384, %v386
    %vm389 = vcmp.eq.f32.partialorder %v384, 0.0
    %v390 = vand.u32 %v384, 2147483648
    %v391 = vsel %vm389, %v390, %v388
    %v392 = vadd.f32 %v391, 1e-06
    %v393 = vrcp.pop %v392
    %v394 = vmul.f32 %v377, %v393
    %v395 = vmul.f32 %v378, %v393
    %v396 = vpack.c.bf16 %v394, %v394
    %v397 = vpack.c.bf16 %v395, %v395
    %v398 = vld [vmem:[#allocation8] sm:$0xff]
    %v399 = vld [vmem:[#allocation8 + $0x10] sm:$0xff]
    %v400 = vld [vmem:[#allocation8 + $0x20] sm:$0xff]
    %v401 = vld [vmem:[#allocation8 + $0x30] sm:$0xff]
    %v402 = vld [vmem:[#allocation8 + $0x40] sm:$0xff]
    %v403 = vld [vmem:[#allocation8 + $0x50] sm:$0xff]
    %v404 = vld [vmem:[#allocation8 + $0x60] sm:$0xff]
    %v405 = vld [vmem:[#allocation8 + $0x70] sm:$0xff]
    %v406 = vld [vmem:[#allocation8 + $0x80] sm:$0xff]
    %v407 = vld [vmem:[#allocation8 + $0x90] sm:$0xff]
    %v408 = vld [vmem:[#allocation8 + $0xa0] sm:$0xff]
    %v409 = vld [vmem:[#allocation8 + $0xb0] sm:$0xff]
    %v410 = vld [vmem:[#allocation8 + $0xc0] sm:$0xff]
    %v411 = vld [vmem:[#allocation8 + $0xd0] sm:$0xff]
    %v412 = vld [vmem:[#allocation8 + $0xe0] sm:$0xff]
    %v413 = vld [vmem:[#allocation8 + $0xf0] sm:$0xff]
    %v414 = vld [vmem:[#allocation8 + $0x100] sm:$0xff]
    %v415 = vld [vmem:[#allocation8 + $0x110] sm:$0xff]
    %v416 = vld [vmem:[#allocation8 + $0x120] sm:$0xff]
    %v417 = vld [vmem:[#allocation8 + $0x130] sm:$0xff]
    %v418 = vld [vmem:[#allocation8 + $0x140] sm:$0xff]
    %v419 = vld [vmem:[#allocation8 + $0x150] sm:$0xff]
    %v420 = vld [vmem:[#allocation8 + $0x160] sm:$0xff]
    %v421 = vld [vmem:[#allocation8 + $0x170] sm:$0xff]
    %v422 = vld [vmem:[#allocation8 + $0x180] sm:$0xff]
    %v423 = vld [vmem:[#allocation8 + $0x190] sm:$0xff]
    %v424 = vld [vmem:[#allocation8 + $0x1a0] sm:$0xff]
    %v425 = vld [vmem:[#allocation8 + $0x1b0] sm:$0xff]
    %v426 = vld [vmem:[#allocation8 + $0x1c0] sm:$0xff]
    %v427 = vld [vmem:[#allocation8 + $0x1d0] sm:$0xff]
    %v428 = vld [vmem:[#allocation8 + $0x1e0] sm:$0xff]
    %v429 = vld [vmem:[#allocation8 + $0x1f0] sm:$0xff]
    %v430 = vld [vmem:[#allocation11 + $0x6] sm:$0x3]
    %v432 = vlaneseq
    %v433 = vshrl.u32 %v432, 7
    %v434 = vsub.s32 0, %v433
    %v435 = vrot.slane %v430, %v434
    %v436 = vlaneseq
    %v437 = vshrl.u32 %v436, 7
    %v438 = vsub.s32 1, %v437
    %v439 = vrot.slane %v430, %v438
    %v474 = vunpack.c.l.b16 %v398
    %v475 = vunpack.c.h.b16 %v398
    %v476 = vunpack.c.l.b16 %v399
    %v477 = vunpack.c.h.b16 %v399
    %v478 = vunpack.c.l.b16 %v400
    %v479 = vunpack.c.h.b16 %v400
    %v480 = vunpack.c.l.b16 %v401
    %v481 = vunpack.c.h.b16 %v401
    %v482 = vunpack.c.l.b16 %v402
    %v483 = vunpack.c.h.b16 %v402
    %v484 = vunpack.c.l.b16 %v403
    %v485 = vunpack.c.h.b16 %v403
    %v486 = vunpack.c.l.b16 %v404
    %v487 = vunpack.c.h.b16 %v404
    %v488 = vunpack.c.l.b16 %v405
    %v489 = vunpack.c.h.b16 %v405
    %v490 = vunpack.c.l.b16 %v406
    %v491 = vunpack.c.h.b16 %v406
    %v492 = vunpack.c.l.b16 %v407
    %v493 = vunpack.c.h.b16 %v407
    %v494 = vunpack.c.l.b16 %v408
    %v495 = vunpack.c.h.b16 %v408
    %v496 = vunpack.c.l.b16 %v409
    %v497 = vunpack.c.h.b16 %v409
    %v498 = vunpack.c.l.b16 %v410
    %v499 = vunpack.c.h.b16 %v410
    %v500 = vunpack.c.l.b16 %v411
    %v501 = vunpack.c.h.b16 %v411
    %v502 = vunpack.c.l.b16 %v412
    %v503 = vunpack.c.h.b16 %v412
    %v504 = vunpack.c.l.b16 %v413
    %v505 = vunpack.c.h.b16 %v413
    %v506 = vunpack.c.l.b16 %v414
    %v507 = vunpack.c.h.b16 %v414
    %v508 = vunpack.c.l.b16 %v415
    %v509 = vunpack.c.h.b16 %v415
    %v510 = vunpack.c.l.b16 %v416
    %v511 = vunpack.c.h.b16 %v416
    %v512 = vunpack.c.l.b16 %v417
    %v513 = vunpack.c.h.b16 %v417
    %v514 = vunpack.c.l.b16 %v418
    %v515 = vunpack.c.h.b16 %v418
    %v516 = vunpack.c.l.b16 %v419
    %v517 = vunpack.c.h.b16 %v419
    %v518 = vunpack.c.l.b16 %v420
    %v519 = vunpack.c.h.b16 %v420
    %v520 = vunpack.c.l.b16 %v421
    %v521 = vunpack.c.h.b16 %v421
    %v522 = vunpack.c.l.b16 %v422
    %v523 = vunpack.c.h.b16 %v422
    %v524 = vunpack.c.l.b16 %v423
    %v525 = vunpack.c.h.b16 %v423
    %v526 = vunpack.c.l.b16 %v424
    %v527 = vunpack.c.h.b16 %v424
    %v528 = vunpack.c.l.b16 %v425
    %v529 = vunpack.c.h.b16 %v425
    %v530 = vunpack.c.l.b16 %v426
    %v531 = vunpack.c.h.b16 %v426
    %v532 = vunpack.c.l.b16 %v427
    %v533 = vunpack.c.h.b16 %v427
    %v534 = vunpack.c.l.b16 %v428
    %v535 = vunpack.c.h.b16 %v428
    %v536 = vunpack.c.l.b16 %v429
    %v537 = vunpack.c.h.b16 %v429
    %v538 = vpack.c.b16 %v476, %v474
    %v539 = vpack.c.b16 %v477, %v475
    %v540 = vpack.c.b16 %v480, %v478
    %v541 = vpack.c.b16 %v481, %v479
    %v542 = vpack.c.b16 %v484, %v482
    %v543 = vpack.c.b16 %v485, %v483
    %v544 = vpack.c.b16 %v488, %v486
    %v545 = vpack.c.b16 %v489, %v487
    %v546 = vpack.c.b16 %v492, %v490
    %v547 = vpack.c.b16 %v493, %v491
    %v548 = vpack.c.b16 %v496, %v494
    %v549 = vpack.c.b16 %v497, %v495
    %v550 = vpack.c.b16 %v500, %v498
    %v551 = vpack.c.b16 %v501, %v499
    %v552 = vpack.c.b16 %v504, %v502
    %v553 = vpack.c.b16 %v505, %v503
    %v554 = vpack.c.b16 %v508, %v506
    %v555 = vpack.c.b16 %v509, %v507
    %v556 = vpack.c.b16 %v512, %v510
    %v557 = vpack.c.b16 %v513, %v511
    %v558 = vpack.c.b16 %v516, %v514
    %v559 = vpack.c.b16 %v517, %v515
    %v560 = vpack.c.b16 %v520, %v518
    %v561 = vpack.c.b16 %v521, %v519
    %v562 = vpack.c.b16 %v524, %v522
    %v563 = vpack.c.b16 %v525, %v523
    %v564 = vpack.c.b16 %v528, %v526
    %v565 = vpack.c.b16 %v529, %v527
    %v566 = vpack.c.b16 %v532, %v530
    %v567 = vpack.c.b16 %v533, %v531
    %v568 = vpack.c.b16 %v536, %v534
    %v569 = vpack.c.b16 %v537, %v535
    %602 = vmatprep.subr.bf16.mxu0 %v553
    %603 = vmatpush1.bf16.msra.mxu0 %v552
    %604 = vmatprep.subr.bf16.mxu0 %v551
    %605 = vmatpush1.bf16.msra.mxu0 %v550
    %606 = vmatprep.subr.bf16.mxu0 %v549
    %607 = vmatpush1.bf16.msra.mxu0 %v548
    %608 = vmatprep.subr.bf16.mxu0 %v547
    %609 = vmatpush1.bf16.msra.mxu0 %v546
    %610 = vmatprep.subr.bf16.mxu0 %v545
    %611 = vmatpush1.bf16.msra.mxu0 %v544
    %612 = vmatprep.subr.bf16.mxu0 %v543
    %613 = vmatpush1.bf16.msra.mxu0 %v542
    %614 = vmatprep.subr.bf16.mxu0 %v541
    %615 = vmatpush1.bf16.msra.mxu0 %v540
    %616 = vmatprep.subr.bf16.mxu0 %v539
    %617 = vmatpush1.bf16.msra.mxu0 %v538
    %618 = vmatprep.subr.bf16.mxu0 %v569
    %619 = vmatpush2.bf16.msra.mxu0 %v568
    %620 = vmatprep.subr.bf16.mxu0 %v567
    %621 = vmatpush2.bf16.msra.mxu0 %v566
    %622 = vmatprep.subr.bf16.mxu0 %v565
    %623 = vmatpush2.bf16.msra.mxu0 %v564
    %624 = vmatprep.subr.bf16.mxu0 %v563
    %625 = vmatpush2.bf16.msra.mxu0 %v562
    %626 = vmatprep.subr.bf16.mxu0 %v561
    %627 = vmatpush2.bf16.msra.mxu0 %v560
    %628 = vmatprep.subr.bf16.mxu0 %v559
    %629 = vmatpush2.bf16.msra.mxu0 %v558
    %630 = vmatprep.subr.bf16.mxu0 %v557
    %631 = vmatpush2.bf16.msra.mxu0 %v556
    %632 = vmatprep.subr.bf16.mxu0 %v555
    %633 = vmatpush2.bf16.msra.mxu0 %v554
    %634 = vmatprep.mubr.bf16.mxu0 %v397
    %635 = vmatmul.mubr.bf16.gmra.mxu0 %v396
    %v636 = vpop.f32.mrf.mxu0
    %v637 = vadd.f32 %v435, %v636
    %v638 = vpop.f32.mrf.mxu0
    %v639 = vadd.f32 %v439, %v638
    %v640 = vpop.f32.mrf.mxu0
    %v641 = vpop.f32.mrf.mxu0
    %642 = vdwg.mxu0
    %v643 = vmax.f32 %v637, 0.0
    %v644 = vmax.f32 %v639, 0.0
    %v645 = vpack.c.bf16 %v643, %v643
    %v646 = vpack.c.bf16 %v644, %v644
    %v647 = vld [vmem:[#allocation8 + $0x8] sm:$0xf]
    %v648 = vld [vmem:[#allocation8 + $0x18] sm:$0xf]
    %v649 = vld [vmem:[#allocation8 + $0x28] sm:$0xf]
    %v650 = vld [vmem:[#allocation8 + $0x38] sm:$0xf]
    %v651 = vld [vmem:[#allocation8 + $0x48] sm:$0xf]
    %v652 = vld [vmem:[#allocation8 + $0x58] sm:$0xf]
    %v653 = vld [vmem:[#allocation8 + $0x68] sm:$0xf]
    %v654 = vld [vmem:[#allocation8 + $0x78] sm:$0xf]
    %v655 = vld [vmem:[#allocation8 + $0x88] sm:$0xf]
    %v656 = vld [vmem:[#allocation8 + $0x98] sm:$0xf]
    %v657 = vld [vmem:[#allocation8 + $0xa8] sm:$0xf]
    %v658 = vld [vmem:[#allocation8 + $0xb8] sm:$0xf]
    %v659 = vld [vmem:[#allocation8 + $0xc8] sm:$0xf]
    %v660 = vld [vmem:[#allocation8 + $0xd8] sm:$0xf]
    %v661 = vld [vmem:[#allocation8 + $0xe8] sm:$0xf]
    %v662 = vld [vmem:[#allocation8 + $0xf8] sm:$0xf]
    %v663 = vld [vmem:[#allocation8 + $0x108] sm:$0xf]
    %v664 = vld [vmem:[#allocation8 + $0x118] sm:$0xf]
    %v665 = vld [vmem:[#allocation8 + $0x128] sm:$0xf]
    %v666 = vld [vmem:[#allocation8 + $0x138] sm:$0xf]
    %v667 = vld [vmem:[#allocation8 + $0x148] sm:$0xf]
    %v668 = vld [vmem:[#allocation8 + $0x158] sm:$0xf]
    %v669 = vld [vmem:[#allocation8 + $0x168] sm:$0xf]
    %v670 = vld [vmem:[#allocation8 + $0x178] sm:$0xf]
    %v671 = vld [vmem:[#allocation8 + $0x188] sm:$0xf]
    %v672 = vld [vmem:[#allocation8 + $0x198] sm:$0xf]
    %v673 = vld [vmem:[#allocation8 + $0x1a8] sm:$0xf]
    %v674 = vld [vmem:[#allocation8 + $0x1b8] sm:$0xf]
    %v675 = vld [vmem:[#allocation8 + $0x1c8] sm:$0xf]
    %v676 = vld [vmem:[#allocation8 + $0x1d8] sm:$0xf]
    %v677 = vld [vmem:[#allocation8 + $0x1e8] sm:$0xf]
    %v678 = vld [vmem:[#allocation8 + $0x1f8] sm:$0xf]
    %v679 = vld [vmem:[#allocation11 + $0x8] sm:$0x1]
    %v681 = vlaneseq
    %v682 = vshrl.u32 %v681, 7
    %v683 = vsub.s32 0, %v682
    %v684 = vrot.slane %v679, %v683
    %v718 = vunpack.c.l.b16 %v647
    %v719 = vunpack.c.l.b16 %v648
    %v720 = vunpack.c.l.b16 %v649
    %v721 = vunpack.c.l.b16 %v650
    %v722 = vunpack.c.l.b16 %v651
    %v723 = vunpack.c.l.b16 %v652
    %v724 = vunpack.c.l.b16 %v653
    %v725 = vunpack.c.l.b16 %v654
    %v726 = vunpack.c.l.b16 %v655
    %v727 = vunpack.c.l.b16 %v656
    %v728 = vunpack.c.l.b16 %v657
    %v729 = vunpack.c.l.b16 %v658
    %v730 = vunpack.c.l.b16 %v659
    %v731 = vunpack.c.l.b16 %v660
    %v732 = vunpack.c.l.b16 %v661
    %v733 = vunpack.c.l.b16 %v662
    %v734 = vunpack.c.l.b16 %v663
    %v735 = vunpack.c.l.b16 %v664
    %v736 = vunpack.c.l.b16 %v665
    %v737 = vunpack.c.l.b16 %v666
    %v738 = vunpack.c.l.b16 %v667
    %v739 = vunpack.c.l.b16 %v668
    %v740 = vunpack.c.l.b16 %v669
    %v741 = vunpack.c.l.b16 %v670
    %v742 = vunpack.c.l.b16 %v671
    %v743 = vunpack.c.l.b16 %v672
    %v744 = vunpack.c.l.b16 %v673
    %v745 = vunpack.c.l.b16 %v674
    %v746 = vunpack.c.l.b16 %v675
    %v747 = vunpack.c.l.b16 %v676
    %v748 = vunpack.c.l.b16 %v677
    %v749 = vunpack.c.l.b16 %v678
    %v750 = vpack.c.b16 %v719, %v718
    %v751 = vpack.c.b16 %v721, %v720
    %v752 = vpack.c.b16 %v723, %v722
    %v753 = vpack.c.b16 %v725, %v724
    %v754 = vpack.c.b16 %v727, %v726
    %v755 = vpack.c.b16 %v729, %v728
    %v756 = vpack.c.b16 %v731, %v730
    %v757 = vpack.c.b16 %v733, %v732
    %v758 = vpack.c.b16 %v735, %v734
    %v759 = vpack.c.b16 %v737, %v736
    %v760 = vpack.c.b16 %v739, %v738
    %v761 = vpack.c.b16 %v741, %v740
    %v762 = vpack.c.b16 %v743, %v742
    %v763 = vpack.c.b16 %v745, %v744
    %v764 = vpack.c.b16 %v747, %v746
    %v765 = vpack.c.b16 %v749, %v748
    %782 = vmatprep.subr.bf16.mxu0 0
    %783 = vmatpush1.bf16.msra.mxu0 %v757
    %784 = vmatprep.subr.bf16.mxu0 0
    %785 = vmatpush1.bf16.msra.mxu0 %v756
    %786 = vmatprep.subr.bf16.mxu0 0
    %787 = vmatpush1.bf16.msra.mxu0 %v755
    %788 = vmatprep.subr.bf16.mxu0 0
    %789 = vmatpush1.bf16.msra.mxu0 %v754
    %790 = vmatprep.subr.bf16.mxu0 0
    %791 = vmatpush1.bf16.msra.mxu0 %v753
    %792 = vmatprep.subr.bf16.mxu0 0
    %793 = vmatpush1.bf16.msra.mxu0 %v752
    %794 = vmatprep.subr.bf16.mxu0 0
    %795 = vmatpush1.bf16.msra.mxu0 %v751
    %796 = vmatprep.subr.bf16.mxu0 0
    %797 = vmatpush1.bf16.msra.mxu0 %v750
    %798 = vmatprep.subr.bf16.mxu0 0
    %799 = vmatpush2.bf16.msra.mxu0 %v765
    %800 = vmatprep.subr.bf16.mxu0 0
    %801 = vmatpush2.bf16.msra.mxu0 %v764
    %802 = vmatprep.subr.bf16.mxu0 0
    %803 = vmatpush2.bf16.msra.mxu0 %v763
    %804 = vmatprep.subr.bf16.mxu0 0
    %805 = vmatpush2.bf16.msra.mxu0 %v762
    %806 = vmatprep.subr.bf16.mxu0 0
    %807 = vmatpush2.bf16.msra.mxu0 %v761
    %808 = vmatprep.subr.bf16.mxu0 0
    %809 = vmatpush2.bf16.msra.mxu0 %v760
    %810 = vmatprep.subr.bf16.mxu0 0
    %811 = vmatpush2.bf16.msra.mxu0 %v759
    %812 = vmatprep.subr.bf16.mxu0 0
    %813 = vmatpush2.bf16.msra.mxu0 %v758
    %814 = vmatprep.mubr.bf16.mxu0 %v646
    %815 = vmatmul.mubr.bf16.gmra.mxu0 %v645
    %v816 = vpop.f32.mrf.mxu0
    %v817 = vadd.f32 %v684, %v816
    %v818 = vpop.f32.mrf.mxu0
    %v819 = vpop.f32.mrf.mxu0
    %v820 = vpop.f32.mrf.mxu0
    %821 = vdwg.mxu0
    %v822 = vtanh.pop %v817
    %v823 = vmul.f32 %v817, 1.442695
    %v824 = vpow.pop %v823
    %v825 = vadd.f32 %v824, 1.0
    %v826 = vlog2.pop %v825
    %v827 = vmul.f32 %v826, 0.6931472
    %v828 = vrsqrt.pop %v825
    %v829 = vmul.f32 %v825, %v828
    %vm830 = vcmp.eq.f32.partialorder %v825, inf
    %v831 = vsel %vm830, %v825, %v829
    %vm832 = vcmp.eq.f32.partialorder %v825, 0.0
    %v833 = vand.u32 %v825, 2147483648
    %v834 = vsel %vm832, %v833, %v831
    %v835 = vld [vmem:[#allocation5] sm:$0xff]
    %837 = vrot.lane.b32.xlu0 %v834, 112
    %v838 = vpop.permute.xlu0 %837
    %v840 = vmul.f32 %v835, %v838
    %v841 = vadd.f32 %v840, %v822
    %v842 = vpack.c.bf16 %v841, %v841
    %v843 = vld [vmem:[#allocation10] sm:$0xff]
    %v844 = vld [vmem:[#allocation10 + $0x8] sm:$0xff]
    %v845 = vld [vmem:[#allocation11 + $0x9] sm:$0x3]
    %v847 = vlaneseq
    %v848 = vshrl.u32 %v847, 7
    %v849 = vsub.s32 0, %v848
    %v850 = vrot.slane %v845, %v849
    %v851 = vlaneseq
    %v852 = vshrl.u32 %v851, 7
    %v853 = vsub.s32 1, %v852
    %v854 = vrot.slane %v845, %v853
    %v859 = vunpack.c.l.b16 %v843
    %v860 = vunpack.c.h.b16 %v843
    %v861 = vunpack.c.l.b16 %v844
    %v862 = vunpack.c.h.b16 %v844
    %v863 = vpack.c.b16 %v861, %v859
    %v864 = vpack.c.b16 %v862, %v860
    %vm867 = vcmask 130048
    %v869 = vsel %vm867, %v842, 0
    %871 = vmatprep.subr.bf16.mxu0 0
    %872 = vmatpush1.bf16.msra.mxu0 0
    %873 = vmatprep.subr.bf16.mxu0 0
    %874 = vmatpush1.bf16.msra.mxu0 0
    %875 = vmatprep.subr.bf16.mxu0 0
    %876 = vmatpush1.bf16.msra.mxu0 0
    %877 = vmatprep.subr.bf16.mxu0 0
    %878 = vmatpush1.bf16.msra.mxu0 0
    %879 = vmatprep.subr.bf16.mxu0 0
    %880 = vmatpush1.bf16.msra.mxu0 0
    %881 = vmatprep.subr.bf16.mxu0 0
    %882 = vmatpush1.bf16.msra.mxu0 0
    %883 = vmatprep.subr.bf16.mxu0 0
    %884 = vmatpush1.bf16.msra.mxu0 0
    %885 = vmatprep.subr.bf16.mxu0 %v864
    %886 = vmatpush1.bf16.msra.mxu0 %v863
    %887 = vmatprep.subr.bf16.mxu0 0
    %888 = vmatpush2.bf16.msra.mxu0 0
    %889 = vmatprep.subr.bf16.mxu0 0
    %890 = vmatpush2.bf16.msra.mxu0 0
    %891 = vmatprep.subr.bf16.mxu0 0
    %892 = vmatpush2.bf16.msra.mxu0 0
    %893 = vmatprep.subr.bf16.mxu0 0
    %894 = vmatpush2.bf16.msra.mxu0 0
    %895 = vmatprep.subr.bf16.mxu0 0
    %896 = vmatpush2.bf16.msra.mxu0 0
    %897 = vmatprep.subr.bf16.mxu0 0
    %898 = vmatpush2.bf16.msra.mxu0 0
    %899 = vmatprep.subr.bf16.mxu0 0
    %900 = vmatpush2.bf16.msra.mxu0 0
    %901 = vmatprep.subr.bf16.mxu0 0
    %902 = vmatpush2.bf16.msra.mxu0 0
    %903 = vmatprep.mubr.bf16.mxu0 0
    %904 = vmatmul.mubr.bf16.gmra.mxu0 %v869
    %v905 = vpop.f32.mrf.mxu0
    %v906 = vadd.f32 %v850, %v905
    %v907 = vpop.f32.mrf.mxu0
    %v908 = vadd.f32 %v854, %v907
    %v909 = vpop.f32.mrf.mxu0
    %v910 = vpop.f32.mrf.mxu0
    %911 = vdwg.mxu0
    %v912 = vmul.f32 %v324, %v906
    %v913 = vmul.f32 %v326, %v908
    %v914 = vadd.f32 %v912, %v913
    %915 = vadd.xlane.f32.xlu0 %v914
    %v916 = vpop.xlane.xlu0 %915
    %v917 = vmul.f32 %v916, 0.00390625
    %v918 = vsub.f32 %v912, %v917
    %v919 = vsub.f32 %v913, %v917
    %v920 = vmul.f32 %v918, %v918
    %v921 = vmul.f32 %v919, %v919
    %v922 = vadd.f32 %v920, %v921
    %923 = vadd.xlane.f32.xlu0 %v922
    %v924 = vpop.xlane.xlu0 %923
    %v925 = vmul.f32 %v924, 0.003921569
    %v926 = vrsqrt.pop %v925
    %v927 = vmul.f32 %v925, %v926
    %vm928 = vcmp.eq.f32.partialorder %v925, inf
    %v929 = vsel %vm928, %v925, %v927
    %vm930 = vcmp.eq.f32.partialorder %v925, 0.0
    %v931 = vand.u32 %v925, 2147483648
    %v932 = vsel %vm930, %v931, %v929
    %v933 = vadd.f32 %v932, 1e-06
    %v934 = vrcp.pop %v933
    %v935 = vmul.f32 %v918, %v934
    %v936 = vmul.f32 %v919, %v934
    %v937 = vpack.c.bf16 %v935, %v935
    %v938 = vpack.c.bf16 %v936, %v936
    %v939 = vld [vmem:[#allocation8 + $0xc] sm:$0xf]
    %v940 = vld [vmem:[#allocation8 + $0x1c] sm:$0xf]
    %v941 = vld [vmem:[#allocation8 + $0x2c] sm:$0xf]
    %v942 = vld [vmem:[#allocation8 + $0x3c] sm:$0xf]
    %v943 = vld [vmem:[#allocation8 + $0x4c] sm:$0xf]
    %v944 = vld [vmem:[#allocation8 + $0x5c] sm:$0xf]
    %v945 = vld [vmem:[#allocation8 + $0x6c] sm:$0xf]
    %v946 = vld [vmem:[#allocation8 + $0x7c] sm:$0xf]
    %v947 = vld [vmem:[#allocation8 + $0x8c] sm:$0xf]
    %v948 = vld [vmem:[#allocation8 + $0x9c] sm:$0xf]
    %v949 = vld [vmem:[#allocation8 + $0xac] sm:$0xf]
    %v950 = vld [vmem:[#allocation8 + $0xbc] sm:$0xf]
    %v951 = vld [vmem:[#allocation8 + $0xcc] sm:$0xf]
    %v952 = vld [vmem:[#allocation8 + $0xdc] sm:$0xf]
    %v953 = vld [vmem:[#allocation8 + $0xec] sm:$0xf]
    %v954 = vld [vmem:[#allocation8 + $0xfc] sm:$0xf]
    %v955 = vld [vmem:[#allocation8 + $0x10c] sm:$0xf]
    %v956 = vld [vmem:[#allocation8 + $0x11c] sm:$0xf]
    %v957 = vld [vmem:[#allocation8 + $0x12c] sm:$0xf]
    %v958 = vld [vmem:[#allocation8 + $0x13c] sm:$0xf]
    %v959 = vld [vmem:[#allocation8 + $0x14c] sm:$0xf]
    %v960 = vld [vmem:[#allocation8 + $0x15c] sm:$0xf]
    %v961 = vld [vmem:[#allocation8 + $0x16c] sm:$0xf]
    %v962 = vld [vmem:[#allocation8 + $0x17c] sm:$0xf]
    %v963 = vld [vmem:[#allocation8 + $0x18c] sm:$0xf]
    %v964 = vld [vmem:[#allocation8 + $0x19c] sm:$0xf]
    %v965 = vld [vmem:[#allocation8 + $0x1ac] sm:$0xf]
    %v966 = vld [vmem:[#allocation8 + $0x1bc] sm:$0xf]
    %v967 = vld [vmem:[#allocation8 + $0x1cc] sm:$0xf]
    %v968 = vld [vmem:[#allocation8 + $0x1dc] sm:$0xf]
    %v969 = vld [vmem:[#allocation8 + $0x1ec] sm:$0xf]
    %v970 = vld [vmem:[#allocation8 + $0x1fc] sm:$0xf]
    %v971 = vld [vmem:[#allocation11 + $0xb] sm:$0x1]
    %v973 = vlaneseq
    %v974 = vshrl.u32 %v973, 7
    %v975 = vsub.s32 0, %v974
    %v976 = vrot.slane %v971, %v975
    %v1010 = vunpack.c.l.b16 %v939
    %v1011 = vunpack.c.l.b16 %v940
    %v1012 = vunpack.c.l.b16 %v941
    %v1013 = vunpack.c.l.b16 %v942
    %v1014 = vunpack.c.l.b16 %v943
    %v1015 = vunpack.c.l.b16 %v944
    %v1016 = vunpack.c.l.b16 %v945
    %v1017 = vunpack.c.l.b16 %v946
    %v1018 = vunpack.c.l.b16 %v947
    %v1019 = vunpack.c.l.b16 %v948
    %v1020 = vunpack.c.l.b16 %v949
    %v1021 = vunpack.c.l.b16 %v950
    %v1022 = vunpack.c.l.b16 %v951
    %v1023 = vunpack.c.l.b16 %v952
    %v1024 = vunpack.c.l.b16 %v953
    %v1025 = vunpack.c.l.b16 %v954
    %v1026 = vunpack.c.l.b16 %v955
    %v1027 = vunpack.c.l.b16 %v956
    %v1028 = vunpack.c.l.b16 %v957
    %v1029 = vunpack.c.l.b16 %v958
    %v1030 = vunpack.c.l.b16 %v959
    %v1031 = vunpack.c.l.b16 %v960
    %v1032 = vunpack.c.l.b16 %v961
    %v1033 = vunpack.c.l.b16 %v962
    %v1034 = vunpack.c.l.b16 %v963
    %v1035 = vunpack.c.l.b16 %v964
    %v1036 = vunpack.c.l.b16 %v965
    %v1037 = vunpack.c.l.b16 %v966
    %v1038 = vunpack.c.l.b16 %v967
    %v1039 = vunpack.c.l.b16 %v968
    %v1040 = vunpack.c.l.b16 %v969
    %v1041 = vunpack.c.l.b16 %v970
    %v1042 = vpack.c.b16 %v1011, %v1010
    %v1043 = vpack.c.b16 %v1013, %v1012
    %v1044 = vpack.c.b16 %v1015, %v1014
    %v1045 = vpack.c.b16 %v1017, %v1016
    %v1046 = vpack.c.b16 %v1019, %v1018
    %v1047 = vpack.c.b16 %v1021, %v1020
    %v1048 = vpack.c.b16 %v1023, %v1022
    %v1049 = vpack.c.b16 %v1025, %v1024
    %v1050 = vpack.c.b16 %v1027, %v1026
    %v1051 = vpack.c.b16 %v1029, %v1028
    %v1052 = vpack.c.b16 %v1031, %v1030
    %v1053 = vpack.c.b16 %v1033, %v1032
    %v1054 = vpack.c.b16 %v1035, %v1034
    %v1055 = vpack.c.b16 %v1037, %v1036
    %v1056 = vpack.c.b16 %v1039, %v1038
    %v1057 = vpack.c.b16 %v1041, %v1040
    %1074 = vmatprep.subr.bf16.mxu0 0
    %1075 = vmatpush1.bf16.msra.mxu0 %v1049
    %1076 = vmatprep.subr.bf16.mxu0 0
    %1077 = vmatpush1.bf16.msra.mxu0 %v1048
    %1078 = vmatprep.subr.bf16.mxu0 0
    %1079 = vmatpush1.bf16.msra.mxu0 %v1047
    %1080 = vmatprep.subr.bf16.mxu0 0
    %1081 = vmatpush1.bf16.msra.mxu0 %v1046
    %1082 = vmatprep.subr.bf16.mxu0 0
    %1083 = vmatpush1.bf16.msra.mxu0 %v1045
    %1084 = vmatprep.subr.bf16.mxu0 0
    %1085 = vmatpush1.bf16.msra.mxu0 %v1044
    %1086 = vmatprep.subr.bf16.mxu0 0
    %1087 = vmatpush1.bf16.msra.mxu0 %v1043
    %1088 = vmatprep.subr.bf16.mxu0 0
    %1089 = vmatpush1.bf16.msra.mxu0 %v1042
    %1090 = vmatprep.subr.bf16.mxu0 0
    %1091 = vmatpush2.bf16.msra.mxu0 %v1057
    %1092 = vmatprep.subr.bf16.mxu0 0
    %1093 = vmatpush2.bf16.msra.mxu0 %v1056
    %1094 = vmatprep.subr.bf16.mxu0 0
    %1095 = vmatpush2.bf16.msra.mxu0 %v1055
    %1096 = vmatprep.subr.bf16.mxu0 0
    %1097 = vmatpush2.bf16.msra.mxu0 %v1054
    %1098 = vmatprep.subr.bf16.mxu0 0
    %1099 = vmatpush2.bf16.msra.mxu0 %v1053
    %1100 = vmatprep.subr.bf16.mxu0 0
    %1101 = vmatpush2.bf16.msra.mxu0 %v1052
    %1102 = vmatprep.subr.bf16.mxu0 0
    %1103 = vmatpush2.bf16.msra.mxu0 %v1051
    %1104 = vmatprep.subr.bf16.mxu0 0
    %1105 = vmatpush2.bf16.msra.mxu0 %v1050
    %1106 = vmatprep.mubr.bf16.mxu0 %v938
    %1107 = vmatmul.mubr.bf16.gmra.mxu0 %v937
    %v1108 = vpop.f32.mrf.mxu0
    %v1109 = vadd.f32 %v976, %v1108
    %v1110 = vpop.f32.mrf.mxu0
    %v1111 = vpop.f32.mrf.mxu0
    %v1112 = vpop.f32.mrf.mxu0
    %1113 = vdwg.mxu0
    %v1114 = vtanh.pop %v1109
    %1116 = vrot.lane.b32.xlu0 %v1114, 32
    %v1117 = vpop.permute.xlu0 %1116
    %v1119 = vsel %vm867, %v822, %v827
    %vm1120 = vcmask 261120
    %v1121 = vsel %vm1120, %v1119, %v1117
    %v1122 = vsel %vm225, %v1121, 0.0
    %1123 = vst [vmem:[#allocation13] sm:$0xff] %v1122
    // Predicated region
    $region50: #{tpu_custom_call.1} parent=1 // pred_check
      _
    $region51: #{tpu_custom_call.1} parent=1 // pred_check_branch
      %1125 = sbr.rel (0) target = $region53
    $region52: #{tpu_custom_call.1} parent=1 // pred_region
      %s1127 = ssub.s32 128, 128
      %1128 = vsyncadd [#allocation4], %s1127
      %s1130 = sshll.u32 [#allocation13], 4
      %s1131 = int_to_ptr.vmem [resolvable:$true] %s1130
      %1133 = dma.vmem_to_hbm [thread:$0]  %s1131, 128, %s6, [#allocation4]
    $region53: #{tpu_custom_call.1} parent=1 // pred_fallthru
      _
    // Predicated region
    $region54: #{tpu_custom_call.1} parent=1 // pred_check
      _
    $region55: #{tpu_custom_call.1} parent=1 // pred_check_branch
      %1135 = sbr.rel (0) target = $region57
    $region56: #{tpu_custom_call.1} parent=1 // pred_region
      %1136 = dma.done [#allocation4], 128
    $region57: #{tpu_custom_call.1} parent=1 // pred_fallthru
      _
    %1137 = vsyncpa [#allocation3], 1
    %1138 = vsyncpa [#allocation6], 1
    %1139 = vsyncpa [#allocation9], 1
    %1140 = vsyncpa [#allocation12], 1
    %1141 = vsyncpa [#allocation4], 1

</llo_original>
